<compile_context>
chip_gen: v7x
topology: tpu7x:2x2x1
jax: 0.10.0
libtpu: 0.0.40
codegen_flags: <defaults>
</compile_context>

<pallas_src>
import functools

import jax
import jax.numpy as jnp
from jax import lax
from jax.experimental import pallas as pl
from jax.experimental.pallas import tpu as pltpu


def _round_up(x, m):
    return ((x + m - 1) // m) * m


def _cdiv(a, b):
    return (a + b - 1) // b


def _vmem_capacity_bytes():
    """Physical VMEM per TensorCore (generation-aware); conservative fallback."""
    try:
        info = pltpu.get_tpu_info()
        for name in ("vmem_capacity_bytes", "vmem_bytes", "vmem_size_bytes"):
            v = getattr(info, name, None)
            if v:
                return int(v)
    except Exception:
        pass
    return 64 * 1024 * 1024  # v7x-sized fallback: safe on every generation


def _balanced_tile(dim, cap, align):
    """Fewest tiles with tile <= cap, then balance them (minimizes padding waste)."""
    g = _cdiv(dim, cap)
    return _round_up(_cdiv(dim, g), align)


def _choose_tiles(M, N, K, itemsize, vmem_cap):
    big_vmem = vmem_cap >= (100 << 20)        # v5e/v6e: 128 MiB; v7x: 64 MiB
    mn_cap = 512 if big_vmem else 256         # bigger tiles -> fewer weight re-streams
    input_budget = (24 << 20) if big_vmem else (16 << 20)  # double-buffered inputs
    vmem_limit = max(32 << 20, min(96 << 20, (vmem_cap * 3) // 4))

    tm = _balanced_tile(M, mn_cap, 8)
    tn = _balanced_tile(N, mn_cap, 128)       # lane-dense output stores

    # Double-buffered (x_tile + w_tile) must fit the input budget.
    max_tk = input_budget // (2 * (tm + tn) * itemsize)
    max_tk = max(128, (max_tk // 128) * 128)
    tk = _balanced_tile(K, min(2048, max_tk), 128)

    # v7x has 2 TensorCores: make sure there are >= 2 "parallel" grid steps.
    if (not big_vmem) and _cdiv(M, tm) * _cdiv(N, tn) == 1 and _cdiv(K, tk) > 1:
        if N > 128:
            tn = _balanced_tile(N, max(128, _round_up(_cdiv(N, 2), 128)), 128)
        elif M > 8:
            tm = _balanced_tile(M, max(8, _round_up(_cdiv(M, 2), 8)), 8)

    return tm, tn, tk, vmem_limit


def _whole_array_kernel(x_ref, w_ref, o_ref):
    # Tiny-problem fast path: one MXU pass over whole arrays, f32 accumulation.
    o_ref[...] = jnp.dot(
        x_ref[...], w_ref[...], preferred_element_type=jnp.float32
    ).astype(o_ref.dtype)


def _make_matmul_kernel(K, tk, mask_k_tail):
    def kernel(x_ref, w_ref, o_ref):
        k = pl.program_id(2)

        # K is the innermost ("arbitrary") axis and the out BlockSpec ignores k,
        # so o_ref stays VMEM-resident: accumulate into it directly (f32 output).
        @pl.when(k == 0)
        def _():
            o_ref[...] = jnp.zeros_like(o_ref)

        x = x_ref[...]
        w = w_ref[...]
        if mask_k_tail:
            # Zero the out-of-bounds K tail of BOTH operands: OOB reads are
            # undefined (possibly NaN/Inf) and 0 * NaN = NaN, so masking only
            # one side would not be enough.  All-true for non-last K steps.
            rem = K - k * tk
            xcol = lax.broadcasted_iota(jnp.int32, x.shape, 1)
            wrow = lax.broadcasted_iota(jnp.int32, w.shape, 0)
            x = jnp.where(xcol < rem, x, 0).astype(x.dtype)
            w = jnp.where(wrow < rem, w, 0).astype(w.dtype)

        o_ref[...] += jnp.dot(x, w, preferred_element_type=jnp.float32)

    return kernel


@functools.partial(jax.jit, static_argnames=("use_bf16",))
def dense_forward(x, weights, use_bf16=True):
    """Pallas implementation of Dense.forward: out = x @ weights (f32 output)."""
    M, K = x.shape
    K2, N = weights.shape
    if K != K2:
        raise ValueError("inner dims must match")

    out_dtype = jnp.float32
    compute_dtype = jnp.bfloat16 if use_bf16 else jnp.float32
    xc = x.astype(compute_dtype)
    wc = weights.astype(compute_dtype)
    itemsize = jnp.dtype(compute_dtype).itemsize

    vmem_cap = _vmem_capacity_bytes()
    tm, tn, tk, vmem_limit = _choose_tiles(M, N, K, itemsize, vmem_cap)
    gm, gn, gk = _cdiv(M, tm), _cdiv(N, tn), _cdiv(K, tk)

    cost = pl.CostEstimate(
        flops=2 * M * N * K,
        transcendentals=0,
        # x is re-streamed per N tile, weights per M tile.
        bytes_accessed=(gn * M * K + gm * K * N) * itemsize + M * N * 4,
    )

    if gm == 1 and gn == 1 and gk == 1:
        # Whole problem fits one tile: single grid step, whole-array blocks,
        # no padding, masking, or accumulation bookkeeping.
        return pl.pallas_call(
            _whole_array_kernel,
            out_shape=jax.ShapeDtypeStruct((M, N), out_dtype),
            grid=(1,),
            in_specs=[
                pl.BlockSpec((M, K), lambda i: (0, 0)),
                pl.BlockSpec((K, N), lambda i: (0, 0)),
            ],
            out_specs=pl.BlockSpec((M, N), lambda i: (0, 0)),
            compiler_params=pltpu.CompilerParams(
                dimension_semantics=("arbitrary",),
                vmem_limit_bytes=vmem_limit,
            ),
            cost_estimate=cost,
        )(xc, wc)

    mask_k_tail = (K % tk) != 0
    kernel = _make_matmul_kernel(K, tk, mask_k_tail)

    # TODO(synk): if profiling shows exposed DMA on large-K / small-M shapes,
    # try pipeline_mode=pl.Buffered(3) on the weight BlockSpec (watch v7x VMEM).
    return pl.pallas_call(
        kernel,
        out_shape=jax.ShapeDtypeStruct((M, N), out_dtype),
        grid_spec=pltpu.PrefetchScalarGridSpec(
            num_scalar_prefetch=0,
            grid=(gm, gn, gk),
            in_specs=[
                pl.BlockSpec((tm, tk), lambda i, j, k: (i, k)),
                pl.BlockSpec((tk, tn), lambda i, j, k: (k, j)),
            ],
            out_specs=pl.BlockSpec((tm, tn), lambda i, j, k: (i, j)),
        ),
        compiler_params=pltpu.CompilerParams(
            dimension_semantics=("parallel", "parallel", "arbitrary"),
            vmem_limit_bytes=vmem_limit,
        ),
        cost_estimate=cost,
    )(xc, wc)


if __name__ == "__main__":
    # Synthetic "args": nn.init.normal_(weights, mean=args.mean_dense, std=args.std_dense)
    MEAN_DENSE = 0.0
    STD_DENSE = 0.1

    key = jax.random.PRNGKey(0)
    kx, kw, kx2, kw2 = jax.random.split(key, 4)

    # Small shapes consistent with Dense(n1, n2): batch=8, n1=256, n2=128.
    M, n1, n2 = 8, 256, 128
    x = jax.random.normal(kx, (M, n1), dtype=jnp.float32)
    weights = MEAN_DENSE + STD_DENSE * jax.random.normal(kw, (n1, n2), dtype=jnp.float32)

    out = jax.block_until_ready(dense_forward(x, weights))
    # Reference on bf16-rounded inputs with f32 accumulation (matches kernel numerics).
    ref = (x.astype(jnp.bfloat16).astype(jnp.float32)
           @ weights.astype(jnp.bfloat16).astype(jnp.float32))
    assert out.shape == (M, n2)
    assert out.dtype == jnp.float32
    assert jnp.allclose(out, ref, atol=1e-3, rtol=1e-3)

    # Exercise the tiled path: K-accumulation, ragged M/N edges, K-tail masking.
    M2, K2, N2 = 260, 3000, 640
    x2 = jax.random.normal(kx2, (M2, K2), dtype=jnp.float32)
    w2 = STD_DENSE * jax.random.normal(kw2, (K2, N2), dtype=jnp.float32)
    out2 = jax.block_until_ready(dense_forward(x2, w2))
    ref2 = (x2.astype(jnp.bfloat16).astype(jnp.float32)
            @ w2.astype(jnp.bfloat16).astype(jnp.float32))
    assert out2.shape == (M2, N2)
    assert jnp.allclose(out2, ref2, atol=2e-3, rtol=2e-3)

    # Strict-f32 path (use_bf16=False) still matches the plain f32 reference.
    out3 = jax.block_until_ready(dense_forward(x, weights, use_bf16=False))
    assert jnp.allclose(out3, x @ weights, atol=1e-3, rtol=1e-3)

    print("KERNEL_OK")
</pallas_src>

<mosaic_0001>
module attributes {stable_mosaic.version = 11 : i64} {
  func.func @_whole_array_kernel(%arg0: i32, %arg1: memref<8x256xbf16, #tpu.memory_space<vmem>>, %arg2: memref<256x128xbf16, #tpu.memory_space<vmem>>, %arg3: memref<8x128xf32, #tpu.memory_space<vmem>>) attributes {dimension_semantics = [#tpu.dimension_semantics<arbitrary>], iteration_bounds = array<i64: 1>, scalar_prefetch = 0 : i64, scratch_operands = 0 : i64, tpu.core_type = #tpu.core_type<tc>, window_params = [{pipeline_mode = #tpu.pipeline_mode<synchronous>, transform_indices = @transform_0, window_bounds = array<i64: 8, 256>}, {pipeline_mode = #tpu.pipeline_mode<synchronous>, transform_indices = @transform_1, window_bounds = array<i64: 256, 128>}, {pipeline_mode = #tpu.pipeline_mode<synchronous>, transform_indices = @transform_2, window_bounds = array<i64: 8, 128>}]} {
    %c0 = arith.constant 0 : index
    %c0_0 = arith.constant 0 : index
    %0 = vector.load %arg1[%c0, %c0_0] : memref<8x256xbf16, #tpu.memory_space<vmem>>, vector<8x256xbf16>
    %c0_1 = arith.constant 0 : index
    %c0_2 = arith.constant 0 : index
    %1 = vector.load %arg2[%c0_1, %c0_2] : memref<256x128xbf16, #tpu.memory_space<vmem>>, vector<256x128xbf16>
    %cst = arith.constant dense<0.000000e+00> : vector<8x128xf32>
    %2 = tpu.matmul %0, %1, %cst {dimension_numbers = #tpu.dot_dimension_numbers<[1], [0], [0], [1], [0, 0, 1, 1], [], []>} : vector<8x256xbf16>, vector<256x128xbf16>, vector<8x128xf32> -> vector<8x128xf32>
    %c0_3 = arith.constant 0 : index
    %c0_4 = arith.constant 0 : index
    %3 = vector.load %arg3[%c0_3, %c0_4] : memref<8x128xf32, #tpu.memory_space<vmem>>, vector<8x128xf32>
    tpu.vector_store %arg3[%c0_3, %c0_4], %2 {strides = array<i32>} : memref<8x128xf32, #tpu.memory_space<vmem>>, vector<8x128xf32>,
    return
  }
  func.func @transform_0(%arg0: i32) -> (i32, i32) {
    %c0_i32 = arith.constant 0 : i32
    %c0_i32_0 = arith.constant 0 : i32
    %c0_i32_1 = arith.constant 0 : i32
    return %c0_i32, %c0_i32_0 : i32, i32
  }
  func.func @transform_1(%arg0: i32) -> (i32, i32) {
    %c0_i32 = arith.constant 0 : i32
    %c0_i32_0 = arith.constant 0 : i32
    %c0_i32_1 = arith.constant 0 : i32
    return %c0_i32, %c0_i32_0 : i32, i32
  }
  func.func @transform_2(%arg0: i32) -> (i32, i32) {
    %c0_i32 = arith.constant 0 : i32
    %c0_i32_0 = arith.constant 0 : i32
    %c0_i32_1 = arith.constant 0 : i32
    return %c0_i32, %c0_i32_0 : i32, i32
  }
}

</mosaic_0001>

<llo_original>
// kernel: dense_forward.1
$region0: #{dense_forward.1}
  #allocation0 [shape = 'u32[]', space=smem, size = 0x4, offset = 0x4, fixed_abs, tag = 'smem constant byte address 0x4 - core index']
  #allocation1 [shape = 'u32[144,128]{1,0:T(1,128)}', space=vmem, size = 0x12000, scoped, tag = 'internal scratch']
  %s0 = inlined_call_operand.vmem [shape: bf16[8,256], index: 0, kind: input, shape index: {}]
  %s1 = inlined_call_operand.vmem [shape: bf16[256,128], index: 1, kind: input, shape index: {}]
  %s2 = inlined_call_operand.hbm [shape: f32[8,128], index: 2, kind: output, shape index: {}]
  %s3 = sld [smem:[#allocation0]]
  $region18: #{dense_forward.1} parent=0
    _
  %s5 = ssub.s32 1, %s3
  %s6 = scalar_select 0, %s5, %s3
  $region1: #{dense_forward.1} parent=0
    #allocation2 [shape = 'u8[4096]{0}', space=vmem, size = 0x1000, scoped, tag = 'output window, operand 0, single buffered']
    #allocation3 [shape = 's32[1]{0}', space=sflag, size = 0x4, scoped, tag = 'scoped memory for dense_forward.1']
    %7 = vsyncpa [#allocation3], 0
    // Predicated region
    $region2: #{dense_forward.1} parent=1 // pred_check
      _
    $region3: #{dense_forward.1} parent=1 // pred_check_branch
      %9 = sbr.rel (0) target = $region5
    $region4: #{dense_forward.1} parent=1 // pred_region
      _
    $region5: #{dense_forward.1} parent=1 // pred_fallthru
      _
    // Predicated region
    $region6: #{dense_forward.1} parent=1 // pred_check
      _
    $region7: #{dense_forward.1} parent=1 // pred_check_branch
      %11 = sbr.rel (0) target = $region9
    $region8: #{dense_forward.1} parent=1 // pred_region
      _
    $region9: #{dense_forward.1} parent=1 // pred_fallthru
      _
    %v13 = vld [vmem:[%s0] sm:$0xff]
    %v14 = vld [vmem:[%s1] sm:$0xf]
    %v15 = vld [vmem:[%s1 + $0x4] sm:$0xf]
    %v16 = vld [vmem:[%s1 + $0x8] sm:$0xf]
    %v17 = vld [vmem:[%s1 + $0xc] sm:$0xf]
    %v18 = vld [vmem:[%s1 + $0x10] sm:$0xf]
    %v19 = vld [vmem:[%s1 + $0x14] sm:$0xf]
    %v20 = vld [vmem:[%s1 + $0x18] sm:$0xf]
    %v21 = vld [vmem:[%s1 + $0x1c] sm:$0xf]
    %v22 = vld [vmem:[%s1 + $0x20] sm:$0xf]
    %v23 = vld [vmem:[%s1 + $0x24] sm:$0xf]
    %v24 = vld [vmem:[%s1 + $0x28] sm:$0xf]
    %v25 = vld [vmem:[%s1 + $0x2c] sm:$0xf]
    %v26 = vld [vmem:[%s1 + $0x30] sm:$0xf]
    %v27 = vld [vmem:[%s1 + $0x34] sm:$0xf]
    %v28 = vld [vmem:[%s1 + $0x38] sm:$0xf]
    %v29 = vld [vmem:[%s1 + $0x3c] sm:$0xf]
    %v30 = vld [vmem:[%s1 + $0x40] sm:$0xf]
    %v31 = vld [vmem:[%s1 + $0x44] sm:$0xf]
    %v32 = vld [vmem:[%s1 + $0x48] sm:$0xf]
    %v33 = vld [vmem:[%s1 + $0x4c] sm:$0xf]
    %v34 = vld [vmem:[%s1 + $0x50] sm:$0xf]
    %v35 = vld [vmem:[%s1 + $0x54] sm:$0xf]
    %v36 = vld [vmem:[%s1 + $0x58] sm:$0xf]
    %v37 = vld [vmem:[%s1 + $0x5c] sm:$0xf]
    %v38 = vld [vmem:[%s1 + $0x60] sm:$0xf]
    %v39 = vld [vmem:[%s1 + $0x64] sm:$0xf]
    %v40 = vld [vmem:[%s1 + $0x68] sm:$0xf]
    %v41 = vld [vmem:[%s1 + $0x6c] sm:$0xf]
    %v42 = vld [vmem:[%s1 + $0x70] sm:$0xf]
    %v43 = vld [vmem:[%s1 + $0x74] sm:$0xf]
    %v44 = vld [vmem:[%s1 + $0x78] sm:$0xf]
    %v45 = vld [vmem:[%s1 + $0x7c] sm:$0xf]
    %v47 = vunpack.c.l.b16 %v13
    %v48 = vunpack.c.h.b16 %v13
    %v49 = vpack.c.b16 %v47, %v47
    %v50 = vpack.c.b16 %v48, %v48
    %v85 = vunpack.c.l.b16 %v14
    %v86 = vunpack.c.l.b16 %v15
    %v87 = vunpack.c.l.b16 %v16
    %v88 = vunpack.c.l.b16 %v17
    %v89 = vunpack.c.l.b16 %v18
    %v90 = vunpack.c.l.b16 %v19
    %v91 = vunpack.c.l.b16 %v20
    %v92 = vunpack.c.l.b16 %v21
    %v93 = vunpack.c.l.b16 %v22
    %v94 = vunpack.c.l.b16 %v23
    %v95 = vunpack.c.l.b16 %v24
    %v96 = vunpack.c.l.b16 %v25
    %v97 = vunpack.c.l.b16 %v26
    %v98 = vunpack.c.l.b16 %v27
    %v99 = vunpack.c.l.b16 %v28
    %v100 = vunpack.c.l.b16 %v29
    %v101 = vunpack.c.l.b16 %v30
    %v102 = vunpack.c.l.b16 %v31
    %v103 = vunpack.c.l.b16 %v32
    %v104 = vunpack.c.l.b16 %v33
    %v105 = vunpack.c.l.b16 %v34
    %v106 = vunpack.c.l.b16 %v35
    %v107 = vunpack.c.l.b16 %v36
    %v108 = vunpack.c.l.b16 %v37
    %v109 = vunpack.c.l.b16 %v38
    %v110 = vunpack.c.l.b16 %v39
    %v111 = vunpack.c.l.b16 %v40
    %v112 = vunpack.c.l.b16 %v41
    %v113 = vunpack.c.l.b16 %v42
    %v114 = vunpack.c.l.b16 %v43
    %v115 = vunpack.c.l.b16 %v44
    %v116 = vunpack.c.l.b16 %v45
    %v117 = vpack.c.b16 %v86, %v85
    %v118 = vpack.c.b16 %v88, %v87
    %v119 = vpack.c.b16 %v90, %v89
    %v120 = vpack.c.b16 %v92, %v91
    %v121 = vpack.c.b16 %v94, %v93
    %v122 = vpack.c.b16 %v96, %v95
    %v123 = vpack.c.b16 %v98, %v97
    %v124 = vpack.c.b16 %v100, %v99
    %v125 = vpack.c.b16 %v102, %v101
    %v126 = vpack.c.b16 %v104, %v103
    %v127 = vpack.c.b16 %v106, %v105
    %v128 = vpack.c.b16 %v108, %v107
    %v129 = vpack.c.b16 %v110, %v109
    %v130 = vpack.c.b16 %v112, %v111
    %v131 = vpack.c.b16 %v114, %v113
    %v132 = vpack.c.b16 %v116, %v115
    %149 = vmatprep.subr.bf16.mxu0 0
    %150 = vmatpush1.bf16.msra.mxu0 %v117
    %151 = vmatprep.subr.bf16.mxu0 0
    %152 = vmatpush1.bf16.msra.mxu0 %v118
    %153 = vmatprep.subr.bf16.mxu0 0
    %154 = vmatpush1.bf16.msra.mxu0 %v119
    %155 = vmatprep.subr.bf16.mxu0 0
    %156 = vmatpush1.bf16.msra.mxu0 %v120
    %157 = vmatprep.subr.bf16.mxu0 0
    %158 = vmatpush1.bf16.msra.mxu0 %v121
    %159 = vmatprep.subr.bf16.mxu0 0
    %160 = vmatpush1.bf16.msra.mxu0 %v122
    %161 = vmatprep.subr.bf16.mxu0 0
    %162 = vmatpush1.bf16.msra.mxu0 %v123
    %163 = vmatprep.subr.bf16.mxu0 0
    %164 = vmatpush1.bf16.msra.mxu0 %v124
    %165 = vmatprep.subr.bf16.mxu0 0
    %166 = vmatpush1.bf16.msra.mxu0 %v125
    %167 = vmatprep.subr.bf16.mxu0 0
    %168 = vmatpush1.bf16.msra.mxu0 %v126
    %169 = vmatprep.subr.bf16.mxu0 0
    %170 = vmatpush1.bf16.msra.mxu0 %v127
    %171 = vmatprep.subr.bf16.mxu0 0
    %172 = vmatpush1.bf16.msra.mxu0 %v128
    %173 = vmatprep.subr.bf16.mxu0 0
    %174 = vmatpush1.bf16.msra.mxu0 %v129
    %175 = vmatprep.subr.bf16.mxu0 0
    %176 = vmatpush1.bf16.msra.mxu0 %v130
    %177 = vmatprep.subr.bf16.mxu0 0
    %178 = vmatpush1.bf16.msra.mxu0 %v131
    %179 = vmatprep.subr.bf16.mxu0 0
    %180 = vmatpush1.bf16.msra.mxu0 %v132
    %181 = vmatprep.mubr.bf16.mxu0 %v50
    %182 = vmatmul.mubr.bf16.gmra.mrb[0].mxu0 %v49
    %v183 = vpop.f32.mrb[0].mxu0
    %v184 = vadd.f32 0.0, %v183
    %v185 = vpop.f32.mrb[0].mxu0
    %v186 = vpop.f32.mrb[0].mxu0
    %v187 = vpop.f32.mrb[0].mxu0
    %188 = vdwg.mxu0
    %189 = vst [vmem:[#allocation2] sm:$0xff] %v184
    // Predicated region
    $region10: #{dense_forward.1} parent=1 // pred_check
      _
    $region11: #{dense_forward.1} parent=1 // pred_check_branch
      %191 = sbr.rel (0) target = $region13
    $region12: #{dense_forward.1} parent=1 // pred_region
      %s193 = ssub.s32 128, 128
      %194 = vsyncadd [#allocation3], %s193
      %s196 = sshll.u32 [#allocation2], 4
      %s197 = int_to_ptr.vmem [resolvable:$true] %s196
      %199 = dma.vmem_to_hbm [thread:$0]  %s197, 128, %s2, [#allocation3]
    $region13: #{dense_forward.1} parent=1 // pred_fallthru
      _
    // Predicated region
    $region14: #{dense_forward.1} parent=1 // pred_check
      _
    $region15: #{dense_forward.1} parent=1 // pred_check_branch
      %201 = sbr.rel (0) target = $region17
    $region16: #{dense_forward.1} parent=1 // pred_region
      %202 = dma.done [#allocation3], 128
    $region17: #{dense_forward.1} parent=1 // pred_fallthru
      _
    %203 = vsyncpa [#allocation3], 1

</llo_original>
